<compile_context>
chip_gen: v6e
topology: v6e:2x2x1
jax: 0.10.0
libtpu: 0.0.40
codegen_flags: <defaults>
</compile_context>

<pallas_src>
import jax
import jax.numpy as jnp
from jax import lax
from jax.experimental import pallas as pl
from jax.experimental.pallas import tpu as pltpu

_LANE = 128
_SUBLANE = 16          # bf16 sublane packing (also a multiple of 8, so f32-safe)


def _round_up(x, m):
    return ((x + m - 1) // m) * m


# --------------------------------------------------------------------------- #
# Pass 1: neighbor-projection hoist   featWn = features @ W_neigh.T  (N, E)
# --------------------------------------------------------------------------- #
def _neigh_proj_kernel(feat_ref, w_neigh_ref, out_ref):
    out_ref[...] = jnp.dot(feat_ref[...], w_neigh_ref[...],
                           preferred_element_type=jnp.float32).astype(out_ref.dtype)


# --------------------------------------------------------------------------- #
# Pass 2 (tiled reduction over the node table)
# --------------------------------------------------------------------------- #
def _sage_agg_kernel(adj_ref, featwn_ref, invdeg_ref, selff_ref,
                     w_self_ref, w_cls_ref, out_ref, neigh_acc, selfh_acc):
    """One (batch-tile i, node-tile k) grid step.

    adj_ref    : (tb, tn)  0/1 adjacency-mask tile              (compute dtype, exact)
    featwn_ref : (tn, Ep)  hoisted neighbor projection tile     (compute dtype)
    invdeg_ref : (tb, 1)   f32 per-row 1/deg
    selff_ref  : (tb, Fp)  self features of this batch tile     (compute dtype)
    w_self_ref : (Fp, Ep)  W_enc[:, :F].T  (pre-transposed, resident)
    w_cls_ref  : (Ep, Cp)  W_cls.T         (pre-transposed, lane-dense padded)
    out_ref    : (tb, Cp)  f32 scores tile (resident across k)
    neigh_acc  : (tb, Ep)  f32 accumulator for sum of projected neighbor feats
    selfh_acc  : (tb, Ep)  f32 self projection (computed once at k == 0)
    """
    k = pl.program_id(1)

    @pl.when(k == 0)
    def _():
        neigh_acc[...] = jnp.zeros_like(neigh_acc)
        # Spread the epilogue: self projection done once per batch tile.
        selfh_acc[...] = jnp.dot(selff_ref[...], w_self_ref[...],
                                 preferred_element_type=jnp.float32)

    # Partial neighbor-sum in embedding space: mask[:, k-tile] @ featWn[k-tile, :]
    neigh_acc[...] += jnp.dot(adj_ref[...], featwn_ref[...],
                              preferred_element_type=jnp.float32)

    @pl.when(k == pl.num_programs(1) - 1)
    def _():
        # Exact f32 1/deg scaling (mean aggregation), relu, classifier.
        embeds = jnp.maximum(selfh_acc[...] + neigh_acc[...] * invdeg_ref[...], 0.0)
        out_ref[...] = jnp.dot(embeds.astype(w_cls_ref.dtype), w_cls_ref[...],
                               preferred_element_type=jnp.float32)


# --------------------------------------------------------------------------- #
# Pass 2 fast path (whole node table fits a single tile: no scratch / pl.when)
# --------------------------------------------------------------------------- #
def _sage_singleshot_kernel(adj_ref, featwn_ref, invdeg_ref, selff_ref,
                            w_self_ref, w_cls_ref, out_ref):
    neigh = jnp.dot(adj_ref[...], featwn_ref[...],
                    preferred_element_type=jnp.float32)
    h_self = jnp.dot(selff_ref[...], w_self_ref[...],
                     preferred_element_type=jnp.float32)
    embeds = jnp.maximum(h_self + neigh * invdeg_ref[...], 0.0)
    out_ref[...] = jnp.dot(embeds.astype(w_cls_ref.dtype), w_cls_ref[...],
                           preferred_element_type=jnp.float32)


# --------------------------------------------------------------------------- #
# Wrapper
# --------------------------------------------------------------------------- #
def supervised_graphsage_forward(adj_mask, features, self_feats,
                                 w_self_t, w_neigh_t, w_cls_t, *,
                                 inv_deg=None,
                                 tile_b=256, tile_n=512,
                                 compute_dtype=jnp.bfloat16,
                                 vmem_limit_bytes=64 * 1024 * 1024,
                                 split_batch_for_cores=True):
    """GraphSAGE supervised forward.

    adj_mask  : (B, N)  0/1 neighbor-selection mask (mean aggregation support)
    features  : (N, F)  node feature table
    self_feats: (B, F)  features of the batch nodes
    w_self_t  : (F, E)  = W_enc[:, :F].T   (pre-split / pre-transposed)
    w_neigh_t : (F, E)  = W_enc[:, F:].T
    w_cls_t   : (E, C)  = W_cls.T
    inv_deg   : (B,)    optional f32 1/deg; computed from adj_mask if None
    Returns scores.t(): (B, C) float32.
    """
    B, N = adj_mask.shape
    F = features.shape[1]
    E = w_self_t.shape[1]
    C = w_cls_t.shape[1]
    assert features.shape[0] == N and self_feats.shape == (B, F)
    assert w_self_t.shape == (F, E) and w_neigh_t.shape == (F, E)
    assert tile_b % _SUBLANE == 0 and tile_n % _LANE == 0

    if inv_deg is None:
        deg = jnp.sum(adj_mask.astype(jnp.float32), axis=1)
        inv_deg = jnp.where(deg > 0, 1.0 / deg, 0.0)
    inv_deg = inv_deg.astype(jnp.float32).reshape(B, 1)

    # ---- hardware-friendly padded shapes -----------------------------------
    Bp0 = _round_up(B, _SUBLANE)
    tb = min(tile_b, Bp0)
    if split_batch_for_cores and Bp0 // tb < 2 and Bp0 >= 2 * _SUBLANE:
        # Guarantee grid_b >= 2 so the "parallel" batch axis shards across both
        # v7x TensorCores (no-op cost on single-TC v5e/v6e at these sizes).
        tb = _round_up(-(-B // 2), _SUBLANE)
    Bp = _round_up(B, tb)

    tn = min(tile_n, _round_up(N, _LANE))
    Np = _round_up(N, tn)
    Fp = _round_up(F, _LANE)
    Ep = _round_up(E, _LANE)
    Cp = _round_up(C, _LANE)          # lane-dense output slab

    grid_b = Bp // tb
    grid_k = Np // tn
    itemsize = jnp.dtype(compute_dtype).itemsize

    def pad2(x, rows, cols, dtype):
        x = x.astype(dtype)
        return jnp.pad(x, ((0, rows - x.shape[0]), (0, cols - x.shape[1])))

    adj_p = pad2(adj_mask, Bp, Np, compute_dtype)      # 0/1 mask: exact in bf16
    feat_p = pad2(features, Np, Fp, compute_dtype)
    selff_p = pad2(self_feats, Bp, Fp, compute_dtype)
    w_self_p = pad2(w_self_t, Fp, Ep, compute_dtype)
    w_neigh_p = pad2(w_neigh_t, Fp, Ep, compute_dtype)
    w_cls_p = pad2(w_cls_t, Ep, Cp, compute_dtype)
    invdeg_p = pad2(inv_deg, Bp, 1, jnp.float32)

    # ---- pass 1: featWn = features @ W_neigh.T ------------------------------
    proj_cost = pl.CostEstimate(
        flops=2 * Np * Fp * Ep, transcendentals=0,
        bytes_accessed=int((Np * Fp + Fp * Ep + Np * Ep) * itemsize))
    featwn_p = pl.pallas_call(
        _neigh_proj_kernel,
        out_shape=jax.ShapeDtypeStruct((Np, Ep), compute_dtype),
        grid_spec=pltpu.PrefetchScalarGridSpec(
            num_scalar_prefetch=0,
            grid=(grid_k,),
            in_specs=[pl.BlockSpec((tn, Fp), lambda i: (i, 0)),
                      pl.BlockSpec((Fp, Ep), lambda i: (0, 0))],
            out_specs=pl.BlockSpec((tn, Ep), lambda i: (i, 0)),
        ),
        compiler_params=pltpu.CompilerParams(
            dimension_semantics=("parallel",),
            vmem_limit_bytes=vmem_limit_bytes),
        cost_estimate=proj_cost,
    )(feat_p, w_neigh_p)

    # ---- pass 2: aggregation + encoder + classifier -------------------------
    agg_cost = pl.CostEstimate(
        flops=2 * Bp * (Np * Ep + Fp * Ep + Ep * Cp),
        transcendentals=0,
        bytes_accessed=int(
            Bp * Np * itemsize                      # adjacency mask
            + Np * Ep * itemsize * grid_b           # featWn streamed per batch tile
            + Bp * Fp * itemsize                    # self features
            + (Fp * Ep + Ep * Cp) * itemsize        # resident weights
            + Bp * 4 + Bp * Cp * 4),                # 1/deg + f32 output
    )

    if grid_k == 1:
        # Small-problem fast path: whole node table in one tile, no accumulator
        # scratch, no pl.when phases.
        kernel = _sage_singleshot_kernel
        grid = (grid_b,)
        in_specs = [
            pl.BlockSpec((tb, Np), lambda i: (i, 0)),     # adjacency mask
            pl.BlockSpec((Np, Ep), lambda i: (0, 0)),     # featWn (resident)
            pl.BlockSpec((tb, 1), lambda i: (i, 0)),      # 1/deg
            pl.BlockSpec((tb, Fp), lambda i: (i, 0)),     # self features
            pl.BlockSpec((Fp, Ep), lambda i: (0, 0)),     # W_self.T (resident)
            pl.BlockSpec((Ep, Cp), lambda i: (0, 0)),     # W_cls.T  (resident)
        ]
        out_specs = pl.BlockSpec((tb, Cp), lambda i: (i, 0))
        scratch = []
        dims = ("parallel",)
    else:
        kernel = _sage_agg_kernel
        grid = (grid_b, grid_k)                           # reduction axis last
        in_specs = [
            pl.BlockSpec((tb, tn), lambda i, k: (i, k)),  # adjacency mask tile
            pl.BlockSpec((tn, Ep), lambda i, k: (k, 0)),  # featWn tile
            pl.BlockSpec((tb, 1), lambda i, k: (i, 0)),   # 1/deg
            pl.BlockSpec((tb, Fp), lambda i, k: (i, 0)),  # self features
            pl.BlockSpec((Fp, Ep), lambda i, k: (0, 0)),  # W_self.T (resident)
            pl.BlockSpec((Ep, Cp), lambda i, k: (0, 0)),  # W_cls.T  (resident)
        ]
        out_specs = pl.BlockSpec((tb, Cp), lambda i, k: (i, 0))
        scratch = [pltpu.VMEM((tb, Ep), jnp.float32),     # neighbor-sum accumulator
                   pltpu.VMEM((tb, Ep), jnp.float32)]     # self projection
        dims = ("parallel", "arbitrary")

    out_p = pl.pallas_call(
        kernel,
        out_shape=jax.ShapeDtypeStruct((Bp, Cp), jnp.float32),
        grid_spec=pltpu.PrefetchScalarGridSpec(
            num_scalar_prefetch=0,
            grid=grid,
            in_specs=in_specs,
            out_specs=out_specs,
            scratch_shapes=scratch),
        compiler_params=pltpu.CompilerParams(
            dimension_semantics=dims,
            vmem_limit_bytes=vmem_limit_bytes),
        cost_estimate=agg_cost,
    )(adj_p, featwn_p, invdeg_p, selff_p, w_self_p, w_cls_p)

    return out_p[:B, :C]


# --------------------------------------------------------------------------- #
# References
# --------------------------------------------------------------------------- #
def _xavier_uniform(key, shape):
    fan_out, fan_in = shape
    bound = (6.0 / (fan_in + fan_out)) ** 0.5
    return jax.random.uniform(key, shape, jnp.float32, -bound, bound)


def _reference_exact(adj_mask, inv_deg, features, self_feats, w_enc, w_cls):
    """PyTorch-order math in f32: mean-aggregate features, then project."""
    hi = lax.Precision.HIGHEST
    F = features.shape[1]
    neigh = jnp.dot(adj_mask * inv_deg[:, None], features, precision=hi)
    h = (jnp.dot(self_feats, w_enc[:, :F].T, precision=hi)
         + jnp.dot(neigh, w_enc[:, F:].T, precision=hi))
    embeds = jnp.maximum(h, 0.0)
    return jnp.dot(embeds, w_cls.T, precision=hi)


def _reference_kernel_order(adj_mask, inv_deg, features, self_feats, w_enc, w_cls,
                            compute_dtype):
    """Mirrors the kernel dataflow + quantization points (projection hoist)."""
    hi = lax.Precision.HIGHEST
    F = features.shape[1]
    q = lambda x: x.astype(compute_dtype)
    featwn = jnp.dot(q(features), q(w_enc[:, F:].T), precision=hi,
                     preferred_element_type=jnp.float32).astype(compute_dtype)
    neigh = jnp.dot(q(adj_mask), featwn, precision=hi,
                    preferred_element_type=jnp.float32) * inv_deg[:, None]
    h_self = jnp.dot(q(self_feats), q(w_enc[:, :F].T), precision=hi,
                     preferred_element_type=jnp.float32)
    embeds = jnp.maximum(h_self + neigh, 0.0)
    return jnp.dot(embeds.astype(compute_dtype), q(w_cls.T), precision=hi,
                   preferred_element_type=jnp.float32)


if __name__ == "__main__":
    # Small, module-consistent shapes.
    N_NODES = 200       # total nodes in the graph (feature-table rows)
    FEAT_DIM = 16       # raw feature dim
    EMBED_DIM = 32      # enc.embed_dim
    NUM_CLASSES = 7
    BATCH = 24          # len(nodes)

    key = jax.random.PRNGKey(0)
    k_feat, k_adj, k_idx, k_wenc, k_wcls = jax.random.split(key, 5)

    # Node feature table (stand-in for the nn.Embedding feature lookup).
    features = jax.random.normal(k_feat, (N_NODES, FEAT_DIM), jnp.float32)

    # Random adjacency lists for the batch -> 0/1 mask + exact f32 1/deg.
    adj_mask = (jax.random.uniform(k_adj, (BATCH, N_NODES)) < 0.1).astype(jnp.float32)
    adj_mask = adj_mask.at[:, 0].set(jnp.maximum(adj_mask[:, 0], 1.0))   # >=1 neighbor
    deg = jnp.sum(adj_mask, axis=1)
    inv_deg = jnp.where(deg > 0, 1.0 / deg, 0.0)

    # Batch nodes -> their own features.
    node_ids = jax.random.randint(k_idx, (BATCH,), 0, N_NODES)
    self_feats = features[node_ids]                                      # (B, F)
    # TODO(synk): fuse this gather into the kernel via scalar-prefetched node_ids.

    # Deterministic parameter init (xavier_uniform, as in the module / Encoder).
    w_enc = _xavier_uniform(k_wenc, (EMBED_DIM, 2 * FEAT_DIM))           # Encoder.weight
    w_cls = _xavier_uniform(k_wcls, (NUM_CLASSES, EMBED_DIM))            # self.weight

    # Pre-split / pre-transpose weights ONCE (stored this way, not per forward call).
    w_self_t = jnp.asarray(w_enc[:, :FEAT_DIM].T)                        # (F, E)
    w_neigh_t = jnp.asarray(w_enc[:, FEAT_DIM:].T)                       # (F, E)
    w_cls_t = jnp.asarray(w_cls.T)                                       # (E, C)

    fwd = jax.jit(supervised_graphsage_forward,
                  static_argnames=("tile_b", "tile_n", "compute_dtype",
                                   "vmem_limit_bytes", "split_batch_for_cores"))

    # 1) Default tiles, bf16: hits the small-problem fast path (grid_k == 1)
    #    with grid_b == 2 (batch split so both v7x cores would get work).
    out_fast = fwd(adj_mask, features, self_feats, w_self_t, w_neigh_t, w_cls_t,
                   inv_deg=inv_deg, compute_dtype=jnp.bfloat16)
    out_fast = jax.block_until_ready(out_fast)

    # 2) Forced multi-tile reduction path (tile_n=128 -> grid_k=2), bf16.
    out_tiled = fwd(adj_mask, features, self_feats, w_self_t, w_neigh_t, w_cls_t,
                    inv_deg=inv_deg, tile_n=128, compute_dtype=jnp.bfloat16)
    out_tiled = jax.block_until_ready(out_tiled)

    # 3) f32 path on the tiled grid (exactness check of the grid / accumulation).
    out_f32 = fwd(adj_mask, features, self_feats, w_self_t, w_neigh_t, w_cls_t,
                  inv_deg=inv_deg, tile_n=128, compute_dtype=jnp.float32)
    out_f32 = jax.block_until_ready(out_f32)

    ref_exact = _reference_exact(adj_mask, inv_deg, features, self_feats, w_enc, w_cls)
    ref_bf16 = _reference_kernel_order(adj_mask, inv_deg, features, self_feats,
                                       w_enc, w_cls, jnp.bfloat16)

    assert out_fast.shape == (BATCH, NUM_CLASSES)
    assert out_tiled.shape == (BATCH, NUM_CLASSES)
    assert out_f32.shape == (BATCH, NUM_CLASSES)
    assert jnp.allclose(out_fast, ref_bf16, atol=2e-2, rtol=2e-2)
    assert jnp.allclose(out_tiled, ref_bf16, atol=2e-2, rtol=2e-2)
    assert jnp.allclose(out_f32, ref_exact, atol=1e-3, rtol=1e-3)

    print("KERNEL_OK")
</pallas_src>

<mosaic_0001>
module attributes {stable_mosaic.version = 11 : i64} {
  func.func @_neigh_proj_kernel(%arg0: i32, %arg1: memref<256x128xbf16, #tpu.memory_space<vmem>>, %arg2: memref<128x128xbf16, #tpu.memory_space<vmem>>, %arg3: memref<256x128xbf16, #tpu.memory_space<vmem>>) attributes {dimension_semantics = [#tpu.dimension_semantics<parallel>], iteration_bounds = array<i64: 1>, scalar_prefetch = 0 : i64, scratch_operands = 0 : i64, tpu.core_type = #tpu.core_type<tc>, window_params = [{transform_indices = @transform_0, window_bounds = array<i64: 256, 128>}, {pipeline_mode = #tpu.pipeline_mode<synchronous>, transform_indices = @transform_1, window_bounds = array<i64: 128, 128>}, {transform_indices = @transform_2, window_bounds = array<i64: 256, 128>}]} {
    %c0 = arith.constant 0 : index
    %c0_0 = arith.constant 0 : index
    %0 = vector.load %arg1[%c0, %c0_0] : memref<256x128xbf16, #tpu.memory_space<vmem>>, vector<256x128xbf16>
    %c0_1 = arith.constant 0 : index
    %c0_2 = arith.constant 0 : index
    %1 = vector.load %arg2[%c0_1, %c0_2] : memref<128x128xbf16, #tpu.memory_space<vmem>>, vector<128x128xbf16>
    %cst = arith.constant dense<0.000000e+00> : vector<256x128xf32>
    %2 = tpu.matmul %0, %1, %cst {dimension_numbers = #tpu.dot_dimension_numbers<[1], [0], [0], [1], [0, 0, 1, 1], [], []>} : vector<256x128xbf16>, vector<128x128xbf16>, vector<256x128xf32> -> vector<256x128xf32>
    %3 = arith.truncf %2 : vector<256x128xf32> to vector<256x128xbf16>
    %c0_3 = arith.constant 0 : index
    %c0_4 = arith.constant 0 : index
    %4 = vector.load %arg3[%c0_3, %c0_4] : memref<256x128xbf16, #tpu.memory_space<vmem>>, vector<256x128xbf16>
    tpu.vector_store %arg3[%c0_3, %c0_4], %3 {strides = array<i32>} : memref<256x128xbf16, #tpu.memory_space<vmem>>, vector<256x128xbf16>,
    return
  }
  func.func @transform_0(%arg0: i32) -> (i32, i32) {
    %c0_i32 = arith.constant 0 : i32
    %c0_i32_0 = arith.constant 0 : i32
    return %arg0, %c0_i32 : i32, i32
  }
  func.func @transform_1(%arg0: i32) -> (i32, i32) {
    %c0_i32 = arith.constant 0 : i32
    %c0_i32_0 = arith.constant 0 : i32
    %c0_i32_1 = arith.constant 0 : i32
    return %c0_i32, %c0_i32_0 : i32, i32
  }
  func.func @transform_2(%arg0: i32) -> (i32, i32) {
    %c0_i32 = arith.constant 0 : i32
    %c0_i32_0 = arith.constant 0 : i32
    return %arg0, %c0_i32 : i32, i32
  }
}

module attributes {stable_mosaic.version = 11 : i64} {
  func.func @_sage_singleshot_kernel(%arg0: i32, %arg1: memref<16x256xbf16, #tpu.memory_space<vmem>>, %arg2: memref<256x128xbf16, #tpu.memory_space<vmem>>, %arg3: memref<16x1xf32, #tpu.memory_space<vmem>>, %arg4: memref<16x128xbf16, #tpu.memory_space<vmem>>, %arg5: memref<128x128xbf16, #tpu.memory_space<vmem>>, %arg6: memref<128x128xbf16, #tpu.memory_space<vmem>>, %arg7: memref<16x128xf32, #tpu.memory_space<vmem>>) attributes {dimension_semantics = [#tpu.dimension_semantics<parallel>], iteration_bounds = array<i64: 2>, scalar_prefetch = 0 : i64, scratch_operands = 0 : i64, tpu.core_type = #tpu.core_type<tc>, window_params = [{transform_indices = @transform_0, window_bounds = array<i64: 16, 256>}, {pipeline_mode = #tpu.pipeline_mode<synchronous>, transform_indices = @transform_1, window_bounds = array<i64: 256, 128>}, {transform_indices = @transform_2, window_bounds = array<i64: 16, 1>}, {transform_indices = @transform_3, window_bounds = array<i64: 16, 128>}, {pipeline_mode = #tpu.pipeline_mode<synchronous>, transform_indices = @transform_4, window_bounds = array<i64: 128, 128>}, {pipeline_mode = #tpu.pipeline_mode<synchronous>, transform_indices = @transform_5, window_bounds = array<i64: 128, 128>}, {transform_indices = @transform_6, window_bounds = array<i64: 16, 128>}]} {
    %c0 = arith.constant 0 : index
    %c0_0 = arith.constant 0 : index
    %0 = vector.load %arg1[%c0, %c0_0] : memref<16x256xbf16, #tpu.memory_space<vmem>>, vector<16x256xbf16>
    %c0_1 = arith.constant 0 : index
    %c0_2 = arith.constant 0 : index
    %1 = vector.load %arg2[%c0_1, %c0_2] : memref<256x128xbf16, #tpu.memory_space<vmem>>, vector<256x128xbf16>
    %cst = arith.constant dense<0.000000e+00> : vector<16x128xf32>
    %2 = tpu.matmul %0, %1, %cst {dimension_numbers = #tpu.dot_dimension_numbers<[1], [0], [0], [1], [0, 0, 1, 1], [], []>} : vector<16x256xbf16>, vector<256x128xbf16>, vector<16x128xf32> -> vector<16x128xf32>
    %c0_3 = arith.constant 0 : index
    %c0_4 = arith.constant 0 : index
    %3 = vector.load %arg4[%c0_3, %c0_4] : memref<16x128xbf16, #tpu.memory_space<vmem>>, vector<16x128xbf16>
    %c0_5 = arith.constant 0 : index
    %c0_6 = arith.constant 0 : index
    %4 = vector.load %arg5[%c0_5, %c0_6] : memref<128x128xbf16, #tpu.memory_space<vmem>>, vector<128x128xbf16>
    %cst_7 = arith.constant dense<0.000000e+00> : vector<16x128xf32>
    %5 = tpu.matmul %3, %4, %cst_7 {dimension_numbers = #tpu.dot_dimension_numbers<[1], [0], [0], [1], [0, 0, 1, 1], [], []>} : vector<16x128xbf16>, vector<128x128xbf16>, vector<16x128xf32> -> vector<16x128xf32>
    %c0_8 = arith.constant 0 : index
    %c0_9 = arith.constant 0 : index
    %6 = vector.load %arg3[%c0_8, %c0_9] : memref<16x1xf32, #tpu.memory_space<vmem>>, vector<16x1xf32>
    %7 = vector.broadcast %6 : vector<16x1xf32> to vector<16x128xf32>
    %8 = arith.mulf %2, %7 : vector<16x128xf32>
    %9 = arith.addf %5, %8 : vector<16x128xf32>
    %cst_10 = arith.constant 0.000000e+00 : f32
    %10 = vector.broadcast %cst_10 : f32 to vector<16x128xf32>
    %11 = arith.maximumf %9, %10 : vector<16x128xf32>
    %12 = arith.truncf %11 : vector<16x128xf32> to vector<16x128xbf16>
    %c0_11 = arith.constant 0 : index
    %c0_12 = arith.constant 0 : index
    %13 = vector.load %arg6[%c0_11, %c0_12] : memref<128x128xbf16, #tpu.memory_space<vmem>>, vector<128x128xbf16>
    %cst_13 = arith.constant dense<0.000000e+00> : vector<16x128xf32>
    %14 = tpu.matmul %12, %13, %cst_13 {dimension_numbers = #tpu.dot_dimension_numbers<[1], [0], [0], [1], [0, 0, 1, 1], [], []>} : vector<16x128xbf16>, vector<128x128xbf16>, vector<16x128xf32> -> vector<16x128xf32>
    %c0_14 = arith.constant 0 : index
    %c0_15 = arith.constant 0 : index
    %15 = vector.load %arg7[%c0_14, %c0_15] : memref<16x128xf32, #tpu.memory_space<vmem>>, vector<16x128xf32>
    tpu.vector_store %arg7[%c0_14, %c0_15], %14 {strides = array<i32>} : memref<16x128xf32, #tpu.memory_space<vmem>>, vector<16x128xf32>,
    return
  }
  func.func @transform_0(%arg0: i32) -> (i32, i32) {
    %c0_i32 = arith.constant 0 : i32
    %c0_i32_0 = arith.constant 0 : i32
    return %arg0, %c0_i32 : i32, i32
  }
  func.func @transform_1(%arg0: i32) -> (i32, i32) {
    %c0_i32 = arith.constant 0 : i32
    %c0_i32_0 = arith.constant 0 : i32
    %c0_i32_1 = arith.constant 0 : i32
    return %c0_i32, %c0_i32_0 : i32, i32
  }
  func.func @transform_2(%arg0: i32) -> (i32, i32) {
    %c0_i32 = arith.constant 0 : i32
    %c0_i32_0 = arith.constant 0 : i32
    return %arg0, %c0_i32 : i32, i32
  }
  func.func @transform_3(%arg0: i32) -> (i32, i32) {
    %c0_i32 = arith.constant 0 : i32
    %c0_i32_0 = arith.constant 0 : i32
    return %arg0, %c0_i32 : i32, i32
  }
  func.func @transform_4(%arg0: i32) -> (i32, i32) {
    %c0_i32 = arith.constant 0 : i32
    %c0_i32_0 = arith.constant 0 : i32
    %c0_i32_1 = arith.constant 0 : i32
    return %c0_i32, %c0_i32_0 : i32, i32
  }
  func.func @transform_5(%arg0: i32) -> (i32, i32) {
    %c0_i32 = arith.constant 0 : i32
    %c0_i32_0 = arith.constant 0 : i32
    %c0_i32_1 = arith.constant 0 : i32
    return %c0_i32, %c0_i32_0 : i32, i32
  }
  func.func @transform_6(%arg0: i32) -> (i32, i32) {
    %c0_i32 = arith.constant 0 : i32
    %c0_i32_0 = arith.constant 0 : i32
    return %arg0, %c0_i32 : i32, i32
  }
}

</mosaic_0001>

<llo_original>
// kernel: supervised_graphsage_forward.2
$region0: #{supervised_graphsage_forward.2}
  #allocation0 [shape = 'u32[]', space=smem, size = 0x4, offset = 0x4, fixed_abs, tag = 'smem constant byte address 0x4 - core index']
  #allocation1 [shape = 'u32[144,128]{1,0:T(1,128)}', space=vmem, size = 0x12000, scoped, tag = 'internal scratch']
  %s0 = inlined_call_operand.vmem [shape: bf16[256,128], index: 0, kind: input, shape index: {}]
  %s1 = inlined_call_operand.vmem [shape: bf16[128,128], index: 1, kind: input, shape index: {}]
  %s2 = inlined_call_operand.vmem [shape: bf16[256,128], index: 2, kind: output, shape index: {}]
  %s3 = sld [smem:[#allocation0]]
  $region18: #{supervised_graphsage_forward.2} parent=0
    _
  %s5 = ssub.s32 1, %s3
  %s6 = scalar_select 0, %s5, %s3
  // Predicated region
  $region2: #{supervised_graphsage_forward.2} parent=0 // pred_check
    _
  $region3: #{supervised_graphsage_forward.2} parent=0 // pred_check_branch
    %8 = sbr.rel (0) target = $region5
  $region4: #{supervised_graphsage_forward.2} parent=0 // pred_region
    _
  $region5: #{supervised_graphsage_forward.2} parent=0 // pred_fallthru
    _
  // Predicated region
  $region6: #{supervised_graphsage_forward.2} parent=0 // pred_check
    _
  $region7: #{supervised_graphsage_forward.2} parent=0 // pred_check_branch
    %10 = sbr.rel (0) target = $region9
  $region8: #{supervised_graphsage_forward.2} parent=0 // pred_region
    _
  $region9: #{supervised_graphsage_forward.2} parent=0 // pred_fallthru
    _
  %v12 = vld [vmem:[%s0] sm:$0xf]
  %v13 = vld [vmem:[%s0 + $0x4] sm:$0xf]
  %v14 = vld [vmem:[%s0 + $0x8] sm:$0xf]
  %v15 = vld [vmem:[%s0 + $0xc] sm:$0xf]
  %v16 = vld [vmem:[%s0 + $0x10] sm:$0xf]
  %v17 = vld [vmem:[%s0 + $0x14] sm:$0xf]
  %v18 = vld [vmem:[%s0 + $0x18] sm:$0xf]
  %v19 = vld [vmem:[%s0 + $0x1c] sm:$0xf]
  %v20 = vld [vmem:[%s0 + $0x20] sm:$0xf]
  %v21 = vld [vmem:[%s0 + $0x24] sm:$0xf]
  %v22 = vld [vmem:[%s0 + $0x28] sm:$0xf]
  %v23 = vld [vmem:[%s0 + $0x2c] sm:$0xf]
  %v24 = vld [vmem:[%s0 + $0x30] sm:$0xf]
  %v25 = vld [vmem:[%s0 + $0x34] sm:$0xf]
  %v26 = vld [vmem:[%s0 + $0x38] sm:$0xf]
  %v27 = vld [vmem:[%s0 + $0x3c] sm:$0xf]
  %v28 = vld [vmem:[%s0 + $0x40] sm:$0xf]
  %v29 = vld [vmem:[%s0 + $0x44] sm:$0xf]
  %v30 = vld [vmem:[%s0 + $0x48] sm:$0xf]
  %v31 = vld [vmem:[%s0 + $0x4c] sm:$0xf]
  %v32 = vld [vmem:[%s0 + $0x50] sm:$0xf]
  %v33 = vld [vmem:[%s0 + $0x54] sm:$0xf]
  %v34 = vld [vmem:[%s0 + $0x58] sm:$0xf]
  %v35 = vld [vmem:[%s0 + $0x5c] sm:$0xf]
  %v36 = vld [vmem:[%s0 + $0x60] sm:$0xf]
  %v37 = vld [vmem:[%s0 + $0x64] sm:$0xf]
  %v38 = vld [vmem:[%s0 + $0x68] sm:$0xf]
  %v39 = vld [vmem:[%s0 + $0x6c] sm:$0xf]
  %v40 = vld [vmem:[%s0 + $0x70] sm:$0xf]
  %v41 = vld [vmem:[%s0 + $0x74] sm:$0xf]
  %v42 = vld [vmem:[%s0 + $0x78] sm:$0xf]
  %v43 = vld [vmem:[%s0 + $0x7c] sm:$0xf]
  %v44 = vld [vmem:[%s1] sm:$0xf]
  %v45 = vld [vmem:[%s1 + $0x4] sm:$0xf]
  %v46 = vld [vmem:[%s1 + $0x8] sm:$0xf]
  %v47 = vld [vmem:[%s1 + $0xc] sm:$0xf]
  %v48 = vld [vmem:[%s1 + $0x10] sm:$0xf]
  %v49 = vld [vmem:[%s1 + $0x14] sm:$0xf]
  %v50 = vld [vmem:[%s1 + $0x18] sm:$0xf]
  %v51 = vld [vmem:[%s1 + $0x1c] sm:$0xf]
  %v52 = vld [vmem:[%s1 + $0x20] sm:$0xf]
  %v53 = vld [vmem:[%s1 + $0x24] sm:$0xf]
  %v54 = vld [vmem:[%s1 + $0x28] sm:$0xf]
  %v55 = vld [vmem:[%s1 + $0x2c] sm:$0xf]
  %v56 = vld [vmem:[%s1 + $0x30] sm:$0xf]
  %v57 = vld [vmem:[%s1 + $0x34] sm:$0xf]
  %v58 = vld [vmem:[%s1 + $0x38] sm:$0xf]
  %v59 = vld [vmem:[%s1 + $0x3c] sm:$0xf]
  %v92 = vunpack.c.l.b16 %v12
  %v93 = vunpack.c.l.b16 %v13
  %v94 = vunpack.c.l.b16 %v14
  %v95 = vunpack.c.l.b16 %v15
  %v96 = vunpack.c.l.b16 %v16
  %v97 = vunpack.c.l.b16 %v17
  %v98 = vunpack.c.l.b16 %v18
  %v99 = vunpack.c.l.b16 %v19
  %v100 = vunpack.c.l.b16 %v20
  %v101 = vunpack.c.l.b16 %v21
  %v102 = vunpack.c.l.b16 %v22
  %v103 = vunpack.c.l.b16 %v23
  %v104 = vunpack.c.l.b16 %v24
  %v105 = vunpack.c.l.b16 %v25
  %v106 = vunpack.c.l.b16 %v26
  %v107 = vunpack.c.l.b16 %v27
  %v108 = vunpack.c.l.b16 %v28
  %v109 = vunpack.c.l.b16 %v29
  %v110 = vunpack.c.l.b16 %v30
  %v111 = vunpack.c.l.b16 %v31
  %v112 = vunpack.c.l.b16 %v32
  %v113 = vunpack.c.l.b16 %v33
  %v114 = vunpack.c.l.b16 %v34
  %v115 = vunpack.c.l.b16 %v35
  %v116 = vunpack.c.l.b16 %v36
  %v117 = vunpack.c.l.b16 %v37
  %v118 = vunpack.c.l.b16 %v38
  %v119 = vunpack.c.l.b16 %v39
  %v120 = vunpack.c.l.b16 %v40
  %v121 = vunpack.c.l.b16 %v41
  %v122 = vunpack.c.l.b16 %v42
  %v123 = vunpack.c.l.b16 %v43
  %v124 = vpack.c.b16 %v93, %v92
  %v125 = vpack.c.b16 %v95, %v94
  %v126 = vpack.c.b16 %v97, %v96
  %v127 = vpack.c.b16 %v99, %v98
  %v128 = vpack.c.b16 %v101, %v100
  %v129 = vpack.c.b16 %v103, %v102
  %v130 = vpack.c.b16 %v105, %v104
  %v131 = vpack.c.b16 %v107, %v106
  %v132 = vpack.c.b16 %v109, %v108
  %v133 = vpack.c.b16 %v111, %v110
  %v134 = vpack.c.b16 %v113, %v112
  %v135 = vpack.c.b16 %v115, %v114
  %v136 = vpack.c.b16 %v117, %v116
  %v137 = vpack.c.b16 %v119, %v118
  %v138 = vpack.c.b16 %v121, %v120
  %v139 = vpack.c.b16 %v123, %v122
  %v172 = vunpack.c.l.b16 %v44
  %v173 = vunpack.c.l.b16 %v45
  %v174 = vunpack.c.l.b16 %v46
  %v175 = vunpack.c.l.b16 %v47
  %v176 = vunpack.c.l.b16 %v48
  %v177 = vunpack.c.l.b16 %v49
  %v178 = vunpack.c.l.b16 %v50
  %v179 = vunpack.c.l.b16 %v51
  %v180 = vunpack.c.l.b16 %v52
  %v181 = vunpack.c.l.b16 %v53
  %v182 = vunpack.c.l.b16 %v54
  %v183 = vunpack.c.l.b16 %v55
  %v184 = vunpack.c.l.b16 %v56
  %v185 = vunpack.c.l.b16 %v57
  %v186 = vunpack.c.l.b16 %v58
  %v187 = vunpack.c.l.b16 %v59
  %v188 = vpack.c.b16 %v173, %v172
  %v189 = vpack.c.b16 %v175, %v174
  %v190 = vpack.c.b16 %v177, %v176
  %v191 = vpack.c.b16 %v179, %v178
  %v192 = vpack.c.b16 %v181, %v180
  %v193 = vpack.c.b16 %v183, %v182
  %v194 = vpack.c.b16 %v185, %v184
  %v195 = vpack.c.b16 %v187, %v186
  %204 = vmatprep.subr.bf16.mxu0 0
  %205 = vmatpush1.bf16.msra.mxu0 %v195
  %206 = vmatprep.subr.bf16.mxu0 0
  %207 = vmatpush1.bf16.msra.mxu0 %v194
  %208 = vmatprep.subr.bf16.mxu0 0
  %209 = vmatpush1.bf16.msra.mxu0 %v193
  %210 = vmatprep.subr.bf16.mxu0 0
  %211 = vmatpush1.bf16.msra.mxu0 %v192
  %212 = vmatprep.subr.bf16.mxu0 0
  %213 = vmatpush1.bf16.msra.mxu0 %v191
  %214 = vmatprep.subr.bf16.mxu0 0
  %215 = vmatpush1.bf16.msra.mxu0 %v190
  %216 = vmatprep.subr.bf16.mxu0 0
  %217 = vmatpush1.bf16.msra.mxu0 %v189
  %218 = vmatprep.subr.bf16.mxu0 0
  %219 = vmatpush1.bf16.msra.mxu0 %v188
  %220 = vmatprep.subr.bf16.mxu0 0
  %221 = vmatpush2.bf16.msra.mxu0 0
  %222 = vmatprep.subr.bf16.mxu0 0
  %223 = vmatpush2.bf16.msra.mxu0 0
  %224 = vmatprep.subr.bf16.mxu0 0
  %225 = vmatpush2.bf16.msra.mxu0 0
  %226 = vmatprep.subr.bf16.mxu0 0
  %227 = vmatpush2.bf16.msra.mxu0 0
  %228 = vmatprep.subr.bf16.mxu0 0
  %229 = vmatpush2.bf16.msra.mxu0 0
  %230 = vmatprep.subr.bf16.mxu0 0
  %231 = vmatpush2.bf16.msra.mxu0 0
  %232 = vmatprep.subr.bf16.mxu0 0
  %233 = vmatpush2.bf16.msra.mxu0 0
  %234 = vmatprep.subr.bf16.mxu0 0
  %235 = vmatpush2.bf16.msra.mxu0 0
  %236 = vmatprep.mubr.bf16.mxu0 0
  %237 = vmatmul.mubr.bf16.gmra.mxu0 %v124
  %v238 = vpop.f32.mrf.mxu0
  %v239 = vadd.f32 0.0, %v238
  %v240 = vpop.f32.mrf.mxu0
  %v241 = vpop.f32.mrf.mxu0
  %v242 = vadd.f32 0.0, %v241
  %v243 = vpop.f32.mrf.mxu0
  %244 = vmatprep.mubr.bf16.mxu0 0
  %245 = vmatmul.mubr.bf16.gmra.mxu0 %v125
  %v246 = vpop.f32.mrf.mxu0
  %v247 = vadd.f32 0.0, %v246
  %v248 = vpop.f32.mrf.mxu0
  %v249 = vpop.f32.mrf.mxu0
  %v250 = vadd.f32 0.0, %v249
  %v251 = vpop.f32.mrf.mxu0
  %252 = vmatprep.mubr.bf16.mxu0 0
  %253 = vmatmul.mubr.bf16.gmra.mxu0 %v126
  %v254 = vpop.f32.mrf.mxu0
  %v255 = vadd.f32 0.0, %v254
  %v256 = vpop.f32.mrf.mxu0
  %v257 = vpop.f32.mrf.mxu0
  %v258 = vadd.f32 0.0, %v257
  %v259 = vpop.f32.mrf.mxu0
  %260 = vmatprep.mubr.bf16.mxu0 0
  %261 = vmatmul.mubr.bf16.gmra.mxu0 %v127
  %v262 = vpop.f32.mrf.mxu0
  %v263 = vadd.f32 0.0, %v262
  %v264 = vpop.f32.mrf.mxu0
  %v265 = vpop.f32.mrf.mxu0
  %v266 = vadd.f32 0.0, %v265
  %v267 = vpop.f32.mrf.mxu0
  %268 = vmatprep.mubr.bf16.mxu0 0
  %269 = vmatmul.mubr.bf16.gmra.mxu0 %v128
  %v270 = vpop.f32.mrf.mxu0
  %v271 = vadd.f32 0.0, %v270
  %v272 = vpop.f32.mrf.mxu0
  %v273 = vpop.f32.mrf.mxu0
  %v274 = vadd.f32 0.0, %v273
  %v275 = vpop.f32.mrf.mxu0
  %276 = vmatprep.mubr.bf16.mxu0 0
  %277 = vmatmul.mubr.bf16.gmra.mxu0 %v129
  %v278 = vpop.f32.mrf.mxu0
  %v279 = vadd.f32 0.0, %v278
  %v280 = vpop.f32.mrf.mxu0
  %v281 = vpop.f32.mrf.mxu0
  %v282 = vadd.f32 0.0, %v281
  %v283 = vpop.f32.mrf.mxu0
  %284 = vmatprep.mubr.bf16.mxu0 0
  %285 = vmatmul.mubr.bf16.gmra.mxu0 %v130
  %v286 = vpop.f32.mrf.mxu0
  %v287 = vadd.f32 0.0, %v286
  %v288 = vpop.f32.mrf.mxu0
  %v289 = vpop.f32.mrf.mxu0
  %v290 = vadd.f32 0.0, %v289
  %v291 = vpop.f32.mrf.mxu0
  %292 = vmatprep.mubr.bf16.mxu0 0
  %293 = vmatmul.mubr.bf16.gmra.mxu0 %v131
  %v294 = vpop.f32.mrf.mxu0
  %v295 = vadd.f32 0.0, %v294
  %v296 = vpop.f32.mrf.mxu0
  %v297 = vpop.f32.mrf.mxu0
  %v298 = vadd.f32 0.0, %v297
  %v299 = vpop.f32.mrf.mxu0
  %300 = vmatprep.mubr.bf16.mxu0 0
  %301 = vmatmul.mubr.bf16.gmra.mxu0 %v132
  %v302 = vpop.f32.mrf.mxu0
  %v303 = vadd.f32 0.0, %v302
  %v304 = vpop.f32.mrf.mxu0
  %v305 = vpop.f32.mrf.mxu0
  %v306 = vadd.f32 0.0, %v305
  %v307 = vpop.f32.mrf.mxu0
  %308 = vmatprep.mubr.bf16.mxu0 0
  %309 = vmatmul.mubr.bf16.gmra.mxu0 %v133
  %v310 = vpop.f32.mrf.mxu0
  %v311 = vadd.f32 0.0, %v310
  %v312 = vpop.f32.mrf.mxu0
  %v313 = vpop.f32.mrf.mxu0
  %v314 = vadd.f32 0.0, %v313
  %v315 = vpop.f32.mrf.mxu0
  %316 = vmatprep.mubr.bf16.mxu0 0
  %317 = vmatmul.mubr.bf16.gmra.mxu0 %v134
  %v318 = vpop.f32.mrf.mxu0
  %v319 = vadd.f32 0.0, %v318
  %v320 = vpop.f32.mrf.mxu0
  %v321 = vpop.f32.mrf.mxu0
  %v322 = vadd.f32 0.0, %v321
  %v323 = vpop.f32.mrf.mxu0
  %324 = vmatprep.mubr.bf16.mxu0 0
  %325 = vmatmul.mubr.bf16.gmra.mxu0 %v135
  %v326 = vpop.f32.mrf.mxu0
  %v327 = vadd.f32 0.0, %v326
  %v328 = vpop.f32.mrf.mxu0
  %v329 = vpop.f32.mrf.mxu0
  %v330 = vadd.f32 0.0, %v329
  %v331 = vpop.f32.mrf.mxu0
  %332 = vmatprep.mubr.bf16.mxu0 0
  %333 = vmatmul.mubr.bf16.gmra.mxu0 %v136
  %v334 = vpop.f32.mrf.mxu0
  %v335 = vadd.f32 0.0, %v334
  %v336 = vpop.f32.mrf.mxu0
  %v337 = vpop.f32.mrf.mxu0
  %v338 = vadd.f32 0.0, %v337
  %v339 = vpop.f32.mrf.mxu0
  %340 = vmatprep.mubr.bf16.mxu0 0
  %341 = vmatmul.mubr.bf16.gmra.mxu0 %v137
  %v342 = vpop.f32.mrf.mxu0
  %v343 = vadd.f32 0.0, %v342
  %v344 = vpop.f32.mrf.mxu0
  %v345 = vpop.f32.mrf.mxu0
  %v346 = vadd.f32 0.0, %v345
  %v347 = vpop.f32.mrf.mxu0
  %348 = vmatprep.mubr.bf16.mxu0 0
  %349 = vmatmul.mubr.bf16.gmra.mxu0 %v138
  %v350 = vpop.f32.mrf.mxu0
  %v351 = vadd.f32 0.0, %v350
  %v352 = vpop.f32.mrf.mxu0
  %v353 = vpop.f32.mrf.mxu0
  %v354 = vadd.f32 0.0, %v353
  %v355 = vpop.f32.mrf.mxu0
  %356 = vmatprep.mubr.bf16.mxu0 0
  %357 = vmatmul.mubr.bf16.gmra.mxu0 %v139
  %v358 = vpop.f32.mrf.mxu0
  %v359 = vadd.f32 0.0, %v358
  %v360 = vpop.f32.mrf.mxu0
  %v361 = vpop.f32.mrf.mxu0
  %v362 = vadd.f32 0.0, %v361
  %v363 = vpop.f32.mrf.mxu0
  %364 = vdwg.mxu0
  %v365 = vpack.c.bf16 %v242, %v239
  %v366 = vpack.c.bf16 %v250, %v247
  %v367 = vpack.c.bf16 %v258, %v255
  %v368 = vpack.c.bf16 %v266, %v263
  %v369 = vpack.c.bf16 %v274, %v271
  %v370 = vpack.c.bf16 %v282, %v279
  %v371 = vpack.c.bf16 %v290, %v287
  %v372 = vpack.c.bf16 %v298, %v295
  %v373 = vpack.c.bf16 %v306, %v303
  %v374 = vpack.c.bf16 %v314, %v311
  %v375 = vpack.c.bf16 %v322, %v319
  %v376 = vpack.c.bf16 %v330, %v327
  %v377 = vpack.c.bf16 %v338, %v335
  %v378 = vpack.c.bf16 %v346, %v343
  %v379 = vpack.c.bf16 %v354, %v351
  %v380 = vpack.c.bf16 %v362, %v359
  %v397 = vunpack.c.l.b16 %v365
  %v398 = vunpack.c.h.b16 %v365
  %v399 = vunpack.c.l.b16 %v366
  %v400 = vunpack.c.h.b16 %v366
  %v401 = vunpack.c.l.b16 %v367
  %v402 = vunpack.c.h.b16 %v367
  %v403 = vunpack.c.l.b16 %v368
  %v404 = vunpack.c.h.b16 %v368
  %v405 = vunpack.c.l.b16 %v369
  %v406 = vunpack.c.h.b16 %v369
  %v407 = vunpack.c.l.b16 %v370
  %v408 = vunpack.c.h.b16 %v370
  %v409 = vunpack.c.l.b16 %v371
  %v410 = vunpack.c.h.b16 %v371
  %v411 = vunpack.c.l.b16 %v372
  %v412 = vunpack.c.h.b16 %v372
  %v413 = vunpack.c.l.b16 %v373
  %v414 = vunpack.c.h.b16 %v373
  %v415 = vunpack.c.l.b16 %v374
  %v416 = vunpack.c.h.b16 %v374
  %v417 = vunpack.c.l.b16 %v375
  %v418 = vunpack.c.h.b16 %v375
  %v419 = vunpack.c.l.b16 %v376
  %v420 = vunpack.c.h.b16 %v376
  %v421 = vunpack.c.l.b16 %v377
  %v422 = vunpack.c.h.b16 %v377
  %v423 = vunpack.c.l.b16 %v378
  %v424 = vunpack.c.h.b16 %v378
  %v425 = vunpack.c.l.b16 %v379
  %v426 = vunpack.c.h.b16 %v379
  %v427 = vunpack.c.l.b16 %v380
  %v428 = vunpack.c.h.b16 %v380
  %v429 = vpack.c.b16 %v397, %v397
  %v430 = vpack.c.b16 %v398, %v398
  %v431 = vpack.c.b16 %v399, %v399
  %v432 = vpack.c.b16 %v400, %v400
  %v433 = vpack.c.b16 %v401, %v401
  %v434 = vpack.c.b16 %v402, %v402
  %v435 = vpack.c.b16 %v403, %v403
  %v436 = vpack.c.b16 %v404, %v404
  %v437 = vpack.c.b16 %v405, %v405
  %v438 = vpack.c.b16 %v406, %v406
  %v439 = vpack.c.b16 %v407, %v407
  %v440 = vpack.c.b16 %v408, %v408
  %v441 = vpack.c.b16 %v409, %v409
  %v442 = vpack.c.b16 %v410, %v410
  %v443 = vpack.c.b16 %v411, %v411
  %v444 = vpack.c.b16 %v412, %v412
  %v445 = vpack.c.b16 %v413, %v413
  %v446 = vpack.c.b16 %v414, %v414
  %v447 = vpack.c.b16 %v415, %v415
  %v448 = vpack.c.b16 %v416, %v416
  %v449 = vpack.c.b16 %v417, %v417
  %v450 = vpack.c.b16 %v418, %v418
  %v451 = vpack.c.b16 %v419, %v419
  %v452 = vpack.c.b16 %v420, %v420
  %v453 = vpack.c.b16 %v421, %v421
  %v454 = vpack.c.b16 %v422, %v422
  %v455 = vpack.c.b16 %v423, %v423
  %v456 = vpack.c.b16 %v424, %v424
  %v457 = vpack.c.b16 %v425, %v425
  %v458 = vpack.c.b16 %v426, %v426
  %v459 = vpack.c.b16 %v427, %v427
  %v460 = vpack.c.b16 %v428, %v428
  %493 = vst [vmem:[%s2] sm:$0xf] %v429
  %494 = vst [vmem:[%s2 + $0x4] sm:$0xf] %v430
  %495 = vst [vmem:[%s2 + $0x8] sm:$0xf] %v431
  %496 = vst [vmem:[%s2 + $0xc] sm:$0xf] %v432
  %497 = vst [vmem:[%s2 + $0x10] sm:$0xf] %v433
  %498 = vst [vmem:[%s2 + $0x14] sm:$0xf] %v434
  %499 = vst [vmem:[%s2 + $0x18] sm:$0xf] %v435
  %500 = vst [vmem:[%s2 + $0x1c] sm:$0xf] %v436
  %501 = vst [vmem:[%s2 + $0x20] sm:$0xf] %v437
  %502 = vst [vmem:[%s2 + $0x24] sm:$0xf] %v438
  %503 = vst [vmem:[%s2 + $0x28] sm:$0xf] %v439
  %504 = vst [vmem:[%s2 + $0x2c] sm:$0xf] %v440
  %505 = vst [vmem:[%s2 + $0x30] sm:$0xf] %v441
  %506 = vst [vmem:[%s2 + $0x34] sm:$0xf] %v442
  %507 = vst [vmem:[%s2 + $0x38] sm:$0xf] %v443
  %508 = vst [vmem:[%s2 + $0x3c] sm:$0xf] %v444
  %509 = vst [vmem:[%s2 + $0x40] sm:$0xf] %v445
  %510 = vst [vmem:[%s2 + $0x44] sm:$0xf] %v446
  %511 = vst [vmem:[%s2 + $0x48] sm:$0xf] %v447
  %512 = vst [vmem:[%s2 + $0x4c] sm:$0xf] %v448
  %513 = vst [vmem:[%s2 + $0x50] sm:$0xf] %v449
  %514 = vst [vmem:[%s2 + $0x54] sm:$0xf] %v450
  %515 = vst [vmem:[%s2 + $0x58] sm:$0xf] %v451
  %516 = vst [vmem:[%s2 + $0x5c] sm:$0xf] %v452
  %517 = vst [vmem:[%s2 + $0x60] sm:$0xf] %v453
  %518 = vst [vmem:[%s2 + $0x64] sm:$0xf] %v454
  %519 = vst [vmem:[%s2 + $0x68] sm:$0xf] %v455
  %520 = vst [vmem:[%s2 + $0x6c] sm:$0xf] %v456
  %521 = vst [vmem:[%s2 + $0x70] sm:$0xf] %v457
  %522 = vst [vmem:[%s2 + $0x74] sm:$0xf] %v458
  %523 = vst [vmem:[%s2 + $0x78] sm:$0xf] %v459
  %524 = vst [vmem:[%s2 + $0x7c] sm:$0xf] %v460
  // Predicated region
  $region10: #{supervised_graphsage_forward.2} parent=0 // pred_check
    _
  $region11: #{supervised_graphsage_forward.2} parent=0 // pred_check_branch
    %526 = sbr.rel (0) target = $region13
  $region12: #{supervised_graphsage_forward.2} parent=0 // pred_region
    _
  $region13: #{supervised_graphsage_forward.2} parent=0 // pred_fallthru
    _
  // Predicated region
  $region14: #{supervised_graphsage_forward.2} parent=0 // pred_check
    _
  $region15: #{supervised_graphsage_forward.2} parent=0 // pred_check_branch
    %528 = sbr.rel (0) target = $region17
  $region16: #{supervised_graphsage_forward.2} parent=0 // pred_region
    _
  $region17: #{supervised_graphsage_forward.2} parent=0 // pred_fallthru
    _

// kernel: supervised_graphsage_forward.3
$region0: #{supervised_graphsage_forward.3}
  #allocation0 [shape = 'u32[]', space=smem, size = 0x4, offset = 0x4, fixed_abs, tag = 'smem constant byte address 0x4 - core index']
  #allocation1 [shape = 'u32[144,128]{1,0:T(1,128)}', space=vmem, size = 0x12000, scoped, tag = 'internal scratch']
  %s0 = inlined_call_operand.vmem [shape: bf16[32,256], index: 0, kind: input, shape index: {}]
  %s1 = inlined_call_operand.vmem [shape: bf16[256,128], index: 1, kind: input, shape index: {}]
  %s2 = inlined_call_operand.vmem [shape: f32[32,1], index: 2, kind: input, shape index: {}]
  %s3 = inlined_call_operand.vmem [shape: bf16[32,128], index: 3, kind: input, shape index: {}]
  %s4 = inlined_call_operand.vmem [shape: bf16[128,128], index: 4, kind: input, shape index: {}]
  %s5 = inlined_call_operand.vmem [shape: bf16[128,128], index: 5, kind: input, shape index: {}]
  %s6 = inlined_call_operand.vmem [shape: f32[32,128], index: 6, kind: output, shape index: {}]
  %s7 = sld [smem:[#allocation0]]
  $region57: #{supervised_graphsage_forward.3} parent=0
    _
  %s9 = ssub.s32 1, %s7
  %s10 = scalar_select 0, %s9, %s7
  loop: start=0, step=1, limit=4
  $region2: #{supervised_graphsage_forward.3} parent=0 // loop_pre_header
    _
  $region3: #{supervised_graphsage_forward.3} parent=0 // loop_header
    %s12 = sphi 0, %s16
    %p13 = scmp.ge.s32.totalorder %s12, 4
    %s22 = sphi 0, %s24
    %s25 = sphi 0, %s22
    %s26 = sphi 0, %s25
    %s42 = sphi 0, %s26
    %s46 = sphi 0, %s46
    %s48 = sphi 0, %s46
    %s49 = sphi 0, %s48
    %s63 = sphi 0, %s49
    %s69 = sphi 0, %s71
    %s72 = sphi 0, %s69
    %s73 = sphi 0, %s72
    %s89 = sphi 0, %s73
    %s95 = sphi 0, %s97
    %s98 = sphi 0, %s95
    %s99 = sphi 0, %s98
    %s115 = sphi 0, %s99
    %s119 = sphi 0, %s119
    %s121 = sphi 0, %s119
    %s122 = sphi 0, %s121
    %s136 = sphi 0, %s122
    %s140 = sphi 0, %s140
    %s142 = sphi 0, %s140
    %s143 = sphi 0, %s142
    %s157 = sphi 0, %s143
    %s163 = sphi 0, %s165
    %s166 = sphi 0, %s163
    %s167 = sphi 0, %s166
    %s183 = sphi 0, %s167
  $region4: #{supervised_graphsage_forward.3} parent=0 // loop_header_branch
    %15 = sbr.rel (%p13) target = $region8
  $region5: #{supervised_graphsage_forward.3} parent=0 // loop_body
    %s17 = ssub.s32 %s12, 1
    %s18 = ssub.s32 %s12, 2
    %s19 = sadd.s32 %s12, 1
    %s20 = ssub.s32 %s12, %s19
    %p21 = scmp.eq.s32.totalorder %s20, 0
    %s23 = sadd.s32 %s22, 1
    %s24 = scalar_select %p21, %s22, %s23
    %p27 = pneg %p21
    %p28 = scmp.eq.s32.totalorder %s12, 1
    %p29 = por %p27, %p28
    %p30 = scmp.ne.s32.totalorder %s22, %s25
    %p31 = scmp.eq.s32.totalorder %s12, 0
    %p32 = por %p30, %p31
    %p33 = scmp.ne.s32.totalorder %s22, %s25
    %p34 = scmp.eq.s32.totalorder %s17, 1
    %p35 = por %p33, %p34
    %p36 = scmp.ne.s32.totalorder %s25, %s26
    %p37 = scmp.eq.s32.totalorder %s17, 0
    %p38 = por %p36, %p37
    %p39 = scmp.ne.s32.totalorder %s25, %s26
    %p40 = scmp.eq.s32.totalorder %s18, 1
    %p41 = por %p39, %p40
    %p43 = scmp.ne.s32.totalorder %s26, %s42
    %p44 = scmp.eq.s32.totalorder %s18, 0
    %p45 = por %p43, %p44
    %s47 = sadd.s32 %s46, 1
    %p50 = scmp.eq.s32.totalorder %s12, 1
    %p51 = scmp.ne.s32.totalorder %s46, %s48
    %p52 = scmp.eq.s32.totalorder %s12, 0
    %p53 = por %p51, %p52
    %p54 = scmp.ne.s32.totalorder %s46, %s48
    %p55 = scmp.eq.s32.totalorder %s17, 1
    %p56 = por %p54, %p55
    %p57 = scmp.ne.s32.totalorder %s48, %s49
    %p58 = scmp.eq.s32.totalorder %s17, 0
    %p59 = por %p57, %p58
    %p60 = scmp.ne.s32.totalorder %s48, %s49
    %p61 = scmp.eq.s32.totalorder %s18, 1
    %p62 = por %p60, %p61
    %p64 = scmp.ne.s32.totalorder %s49, %s63
    %p65 = scmp.eq.s32.totalorder %s18, 0
    %p66 = por %p64, %p65
    %s67 = ssub.s32 %s12, %s19
    %p68 = scmp.eq.s32.totalorder %s67, 0
    %s70 = sadd.s32 %s69, 1
    %s71 = scalar_select %p68, %s69, %s70
    %p74 = pneg %p68
    %p75 = scmp.eq.s32.totalorder %s12, 1
    %p76 = por %p74, %p75
    %p77 = scmp.ne.s32.totalorder %s69, %s72
    %p78 = scmp.eq.s32.totalorder %s12, 0
    %p79 = por %p77, %p78
    %p80 = scmp.ne.s32.totalorder %s69, %s72
    %p81 = scmp.eq.s32.totalorder %s17, 1
    %p82 = por %p80, %p81
    %p83 = scmp.ne.s32.totalorder %s72, %s73
    %p84 = scmp.eq.s32.totalorder %s17, 0
    %p85 = por %p83, %p84
    %p86 = scmp.ne.s32.totalorder %s72, %s73
    %p87 = scmp.eq.s32.totalorder %s18, 1
    %p88 = por %p86, %p87
    %p90 = scmp.ne.s32.totalorder %s73, %s89
    %p91 = scmp.eq.s32.totalorder %s18, 0
    %p92 = por %p90, %p91
    %s93 = ssub.s32 %s12, %s19
    %p94 = scmp.eq.s32.totalorder %s93, 0
    %s96 = sadd.s32 %s95, 1
    %s97 = scalar_select %p94, %s95, %s96
    %p100 = pneg %p94
    %p101 = scmp.eq.s32.totalorder %s12, 1
    %p102 = por %p100, %p101
    %p103 = scmp.ne.s32.totalorder %s95, %s98
    %p104 = scmp.eq.s32.totalorder %s12, 0
    %p105 = por %p103, %p104
    %p106 = scmp.ne.s32.totalorder %s95, %s98
    %p107 = scmp.eq.s32.totalorder %s17, 1
    %p108 = por %p106, %p107
    %p109 = scmp.ne.s32.totalorder %s98, %s99
    %p110 = scmp.eq.s32.totalorder %s17, 0
    %p111 = por %p109, %p110
    %p112 = scmp.ne.s32.totalorder %s98, %s99
    %p113 = scmp.eq.s32.totalorder %s18, 1
    %p114 = por %p112, %p113
    %p116 = scmp.ne.s32.totalorder %s99, %s115
    %p117 = scmp.eq.s32.totalorder %s18, 0
    %p118 = por %p116, %p117
    %s120 = sadd.s32 %s119, 1
    %p123 = scmp.eq.s32.totalorder %s12, 1
    %p124 = scmp.ne.s32.totalorder %s119, %s121
    %p125 = scmp.eq.s32.totalorder %s12, 0
    %p126 = por %p124, %p125
    %p127 = scmp.ne.s32.totalorder %s119, %s121
    %p128 = scmp.eq.s32.totalorder %s17, 1
    %p129 = por %p127, %p128
    %p130 = scmp.ne.s32.totalorder %s121, %s122
    %p131 = scmp.eq.s32.totalorder %s17, 0
    %p132 = por %p130, %p131
    %p133 = scmp.ne.s32.totalorder %s121, %s122
    %p134 = scmp.eq.s32.totalorder %s18, 1
    %p135 = por %p133, %p134
    %p137 = scmp.ne.s32.totalorder %s122, %s136
    %p138 = scmp.eq.s32.totalorder %s18, 0
    %p139 = por %p137, %p138
    %s141 = sadd.s32 %s140, 1
    %p144 = scmp.eq.s32.totalorder %s12, 1
    %p145 = scmp.ne.s32.totalorder %s140, %s142
    %p146 = scmp.eq.s32.totalorder %s12, 0
    %p147 = por %p145, %p146
    %p148 = scmp.ne.s32.totalorder %s140, %s142
    %p149 = scmp.eq.s32.totalorder %s17, 1
    %p150 = por %p148, %p149
    %p151 = scmp.ne.s32.totalorder %s142, %s143
    %p152 = scmp.eq.s32.totalorder %s17, 0
    %p153 = por %p151, %p152
    %p154 = scmp.ne.s32.totalorder %s142, %s143
    %p155 = scmp.eq.s32.totalorder %s18, 1
    %p156 = por %p154, %p155
    %p158 = scmp.ne.s32.totalorder %s143, %s157
    %p159 = scmp.eq.s32.totalorder %s18, 0
    %p160 = por %p158, %p159
    %s161 = ssub.s32 %s12, %s19
    %p162 = scmp.eq.s32.totalorder %s161, 0
    %s164 = sadd.s32 %s163, 1
    %s165 = scalar_select %p162, %s163, %s164
    %p168 = pneg %p162
    %p169 = scmp.eq.s32.totalorder %s12, 1
    %p170 = por %p168, %p169
    %p171 = scmp.ne.s32.totalorder %s163, %s166
    %p172 = scmp.eq.s32.totalorder %s12, 0
    %p173 = por %p171, %p172
    %p174 = scmp.ne.s32.totalorder %s163, %s166
    %p175 = scmp.eq.s32.totalorder %s17, 1
    %p176 = por %p174, %p175
    %p177 = scmp.ne.s32.totalorder %s166, %s167
    %p178 = scmp.eq.s32.totalorder %s17, 0
    %p179 = por %p177, %p178
    %p180 = scmp.ne.s32.totalorder %s166, %s167
    %p181 = scmp.eq.s32.totalorder %s18, 1
    %p182 = por %p180, %p181
    %p184 = scmp.ne.s32.totalorder %s167, %s183
    %p185 = scmp.eq.s32.totalorder %s18, 0
    %p186 = por %p184, %p185
    %p187 = scmp.le.s32.totalorder 1, %s12
    %p188 = scmp.lt.s32.totalorder %s12, 3
    %p189 = pnand %p187, %p188
    %p190 = pneg %p189
    // Predicated region
    $region9: #{supervised_graphsage_forward.3} parent=5 // pred_check
      _
    $region10: #{supervised_graphsage_forward.3} parent=5 // pred_check_branch
      %192 = sbr.rel (%p189) target = $region12
    $region11: #{supervised_graphsage_forward.3} parent=5 // pred_region
      %s193 = ssub.s32 %s12, 1
      // Predicated region
      $region13: #{supervised_graphsage_forward.3} parent=11 // pred_check
        %p194 = pneg %p59
      $region14: #{supervised_graphsage_forward.3} parent=11 // pred_check_branch
        %196 = sbr.rel (%p194) target = $region16
      $region15: #{supervised_graphsage_forward.3} parent=11 // pred_region
        _
      $region16: #{supervised_graphsage_forward.3} parent=11 // pred_fallthru
        _
      // Predicated region
      $region17: #{supervised_graphsage_forward.3} parent=11 // pred_check
        %p197 = pneg %p132
      $region18: #{supervised_graphsage_forward.3} parent=11 // pred_check_branch
        %199 = sbr.rel (%p197) target = $region20
      $region19: #{supervised_graphsage_forward.3} parent=11 // pred_region
        _
      $region20: #{supervised_graphsage_forward.3} parent=11 // pred_fallthru
        _
      // Predicated region
      $region21: #{supervised_graphsage_forward.3} parent=11 // pred_check
        %p200 = pneg %p153
      $region22: #{supervised_graphsage_forward.3} parent=11 // pred_check_branch
        %202 = sbr.rel (%p200) target = $region24
      $region23: #{supervised_graphsage_forward.3} parent=11 // pred_region
        _
      $region24: #{supervised_graphsage_forward.3} parent=11 // pred_fallthru
        _
    $region12: #{supervised_graphsage_forward.3} parent=5 // pred_fallthru
      _
    %p203 = scmp.lt.s32.totalorder %s12, 2
    // Predicated region
    $region25: #{supervised_graphsage_forward.3} parent=5 // pred_check
      %p204 = pneg %p203
    $region26: #{supervised_graphsage_forward.3} parent=5 // pred_check_branch
      %206 = sbr.rel (%p204) target = $region28
    $region27: #{supervised_graphsage_forward.3} parent=5 // pred_region
      // Predicated region
      $region29: #{supervised_graphsage_forward.3} parent=27 // pred_check
        %p207 = pneg %p32
      $region30: #{supervised_graphsage_forward.3} parent=27 // pred_check_branch
        %209 = sbr.rel (%p207) target = $region32
      $region31: #{supervised_graphsage_forward.3} parent=27 // pred_region
        %s210 = smul.u32 2, %s12
        %p211 = scmp.lt.s32.totalorder %s210, 3
        %s212 = scalar_select %p211, %s210, 3
        %s213 = smul.addr %s212, 2
        %s214 = smul.addr %s213, 4
        %s215 = scalar_lea.vmem %s0, %s214
        %s216 = smul.u32 2, %s12
      $region32: #{supervised_graphsage_forward.3} parent=27 // pred_fallthru
        _
      // Predicated region
      $region33: #{supervised_graphsage_forward.3} parent=27 // pred_check
        %p217 = pneg %p79
      $region34: #{supervised_graphsage_forward.3} parent=27 // pred_check_branch
        %219 = sbr.rel (%p217) target = $region36
      $region35: #{supervised_graphsage_forward.3} parent=27 // pred_region
        %s220 = smul.u32 2, %s12
        %p221 = scmp.lt.s32.totalorder %s220, 3
        %s222 = scalar_select %p221, %s220, 3
        %s223 = smul.addr %s222, 8
        %s224 = scalar_lea.vmem %s2, %s223
        %s225 = smul.u32 2, %s12
      $region36: #{supervised_graphsage_forward.3} parent=27 // pred_fallthru
        _
      // Predicated region
      $region37: #{supervised_graphsage_forward.3} parent=27 // pred_check
        %p226 = pneg %p105
      $region38: #{supervised_graphsage_forward.3} parent=27 // pred_check_branch
        %228 = sbr.rel (%p226) target = $region40
      $region39: #{supervised_graphsage_forward.3} parent=27 // pred_region
        %s229 = smul.u32 2, %s12
        %p230 = scmp.lt.s32.totalorder %s229, 3
        %s231 = scalar_select %p230, %s229, 3
        %s232 = smul.addr %s231, 4
        %s233 = scalar_lea.vmem %s3, %s232
        %s234 = smul.u32 2, %s12
      $region40: #{supervised_graphsage_forward.3} parent=27 // pred_fallthru
        _
    $region28: #{supervised_graphsage_forward.3} parent=5 // pred_fallthru
      _
    %p235 = scmp.le.s32.totalorder 1, %s12
    %p236 = scmp.lt.s32.totalorder %s12, 3
    %p237 = pnand %p235, %p236
    %p238 = pneg %p237
    // Predicated region
    $region41: #{supervised_graphsage_forward.3} parent=5 // pred_check
      _
    $region42: #{supervised_graphsage_forward.3} parent=5 // pred_check_branch
      %240 = sbr.rel (%p237) target = $region44
    $region43: #{supervised_graphsage_forward.3} parent=5 // pred_region
      %s241 = ssub.s32 %s12, 1
      %s242 = smul.u32 2, %s17
      %p243 = scmp.lt.s32.totalorder %s242, 3
      %s244 = scalar_select %p243, %s242, 3
      %s245 = smul.addr %s244, 2
      %s246 = smul.addr %s245, 4
      %s247 = scalar_lea.vmem %s0, %s246
      %p248 = pneg %p38
      %p249 = pneg %p35
      %p250 = pneg %p59
      %p251 = pneg %p56
      %s252 = smul.u32 2, %s17
      %p253 = scmp.lt.s32.totalorder %s252, 3
      %s254 = scalar_select %p253, %s252, 3
      %s255 = smul.addr %s254, 8
      %s256 = scalar_lea.vmem %s2, %s255
      %p257 = pneg %p85
      %p258 = pneg %p82
      %s259 = smul.u32 2, %s17
      %p260 = scmp.lt.s32.totalorder %s259, 3
      %s261 = scalar_select %p260, %s259, 3
      %s262 = smul.addr %s261, 4
      %s263 = scalar_lea.vmem %s3, %s262
      %p264 = pneg %p111
      %p265 = pneg %p108
      %p266 = pneg %p132
      %p267 = pneg %p129
      %p268 = pneg %p153
      %p269 = pneg %p150
      %p270 = pneg %p179
      %p271 = pneg %p176
      %s272 = smul.u32 2, %s17
      %p273 = scmp.lt.s32.totalorder %s272, 3
      %s274 = scalar_select %p273, %s272, 3
      %s275 = smul.addr %s274, 8
      %s276 = scalar_lea.vmem %s6, %s275
      %s277 = smul.u32 2, %s17
      %p278 = scmp.lt.s32.totalorder %s277, 3
      %s279 = scalar_select %p278, %s277, 3
      %s280 = smul.addr %s279, 2
      %s281 = smul.addr %s280, 4
      %s282 = scalar_lea.vmem %s0, %s281
      %s283 = smul.u32 2, %s17
      %s284 = smul.u32 2, %s17
      %p285 = scmp.lt.s32.totalorder %s284, 3
      %s286 = scalar_select %p285, %s284, 3
      %s287 = smul.addr %s286, 8
      %s288 = scalar_lea.vmem %s2, %s287
      %s289 = smul.u32 2, %s17
      %s290 = smul.u32 2, %s17
      %p291 = scmp.lt.s32.totalorder %s290, 3
      %s292 = scalar_select %p291, %s290, 3
      %s293 = smul.addr %s292, 4
      %s294 = scalar_lea.vmem %s3, %s293
      %s295 = smul.u32 2, %s17
      %s296 = smul.u32 2, %s17
      %p297 = scmp.lt.s32.totalorder %s296, 3
      %s298 = scalar_select %p297, %s296, 3
      %s299 = smul.addr %s298, 8
      %s300 = scalar_lea.vmem %s6, %s299
      %s301 = smul.u32 2, %s17
      %v303 = vld [vmem:[%s282] sm:$0xff]
      %v304 = vld [vmem:[%s282 + $0x8] sm:$0xff]
      %v305 = vld [vmem:[%s1] sm:$0xf]
      %v306 = vld [vmem:[%s1 + $0x4] sm:$0xf]
      %v307 = vld [vmem:[%s1 + $0x8] sm:$0xf]
      %v308 = vld [vmem:[%s1 + $0xc] sm:$0xf]
      %v309 = vld [vmem:[%s1 + $0x10] sm:$0xf]
      %v310 = vld [vmem:[%s1 + $0x14] sm:$0xf]
      %v311 = vld [vmem:[%s1 + $0x18] sm:$0xf]
      %v312 = vld [vmem:[%s1 + $0x1c] sm:$0xf]
      %v313 = vld [vmem:[%s1 + $0x20] sm:$0xf]
      %v314 = vld [vmem:[%s1 + $0x24] sm:$0xf]
      %v315 = vld [vmem:[%s1 + $0x28] sm:$0xf]
      %v316 = vld [vmem:[%s1 + $0x2c] sm:$0xf]
      %v317 = vld [vmem:[%s1 + $0x30] sm:$0xf]
      %v318 = vld [vmem:[%s1 + $0x34] sm:$0xf]
      %v319 = vld [vmem:[%s1 + $0x38] sm:$0xf]
      %v320 = vld [vmem:[%s1 + $0x3c] sm:$0xf]
      %v321 = vld [vmem:[%s1 + $0x40] sm:$0xf]
      %v322 = vld [vmem:[%s1 + $0x44] sm:$0xf]
      %v323 = vld [vmem:[%s1 + $0x48] sm:$0xf]
      %v324 = vld [vmem:[%s1 + $0x4c] sm:$0xf]
      %v325 = vld [vmem:[%s1 + $0x50] sm:$0xf]
      %v326 = vld [vmem:[%s1 + $0x54] sm:$0xf]
      %v327 = vld [vmem:[%s1 + $0x58] sm:$0xf]
      %v328 = vld [vmem:[%s1 + $0x5c] sm:$0xf]
      %v329 = vld [vmem:[%s1 + $0x60] sm:$0xf]
      %v330 = vld [vmem:[%s1 + $0x64] sm:$0xf]
      %v331 = vld [vmem:[%s1 + $0x68] sm:$0xf]
      %v332 = vld [vmem:[%s1 + $0x6c] sm:$0xf]
      %v333 = vld [vmem:[%s1 + $0x70] sm:$0xf]
      %v334 = vld [vmem:[%s1 + $0x74] sm:$0xf]
      %v335 = vld [vmem:[%s1 + $0x78] sm:$0xf]
      %v336 = vld [vmem:[%s1 + $0x7c] sm:$0xf]
      %v339 = vunpack.c.l.b16 %v303
      %v340 = vunpack.c.h.b16 %v303
      %v341 = vunpack.c.l.b16 %v304
      %v342 = vunpack.c.h.b16 %v304
      %v343 = vpack.c.b16 %v341, %v339
      %v344 = vpack.c.b16 %v342, %v340
      %v379 = vunpack.c.l.b16 %v305
      %v380 = vunpack.c.l.b16 %v306
      %v381 = vunpack.c.l.b16 %v307
      %v382 = vunpack.c.l.b16 %v308
      %v383 = vunpack.c.l.b16 %v309
      %v384 = vunpack.c.l.b16 %v310
      %v385 = vunpack.c.l.b16 %v311
      %v386 = vunpack.c.l.b16 %v312
      %v387 = vunpack.c.l.b16 %v313
      %v388 = vunpack.c.l.b16 %v314
      %v389 = vunpack.c.l.b16 %v315
      %v390 = vunpack.c.l.b16 %v316
      %v391 = vunpack.c.l.b16 %v317
      %v392 = vunpack.c.l.b16 %v318
      %v393 = vunpack.c.l.b16 %v319
      %v394 = vunpack.c.l.b16 %v320
      %v395 = vunpack.c.l.b16 %v321
      %v396 = vunpack.c.l.b16 %v322
      %v397 = vunpack.c.l.b16 %v323
      %v398 = vunpack.c.l.b16 %v324
      %v399 = vunpack.c.l.b16 %v325
      %v400 = vunpack.c.l.b16 %v326
      %v401 = vunpack.c.l.b16 %v327
      %v402 = vunpack.c.l.b16 %v328
      %v403 = vunpack.c.l.b16 %v329
      %v404 = vunpack.c.l.b16 %v330
      %v405 = vunpack.c.l.b16 %v331
      %v406 = vunpack.c.l.b16 %v332
      %v407 = vunpack.c.l.b16 %v333
      %v408 = vunpack.c.l.b16 %v334
      %v409 = vunpack.c.l.b16 %v335
      %v410 = vunpack.c.l.b16 %v336
      %v411 = vpack.c.b16 %v380, %v379
      %v412 = vpack.c.b16 %v382, %v381
      %v413 = vpack.c.b16 %v384, %v383
      %v414 = vpack.c.b16 %v386, %v385
      %v415 = vpack.c.b16 %v388, %v387
      %v416 = vpack.c.b16 %v390, %v389
      %v417 = vpack.c.b16 %v392, %v391
      %v418 = vpack.c.b16 %v394, %v393
      %v419 = vpack.c.b16 %v396, %v395
      %v420 = vpack.c.b16 %v398, %v397
      %v421 = vpack.c.b16 %v400, %v399
      %v422 = vpack.c.b16 %v402, %v401
      %v423 = vpack.c.b16 %v404, %v403
      %v424 = vpack.c.b16 %v406, %v405
      %v425 = vpack.c.b16 %v408, %v407
      %v426 = vpack.c.b16 %v410, %v409
      %443 = vmatprep.subr.bf16.mxu0 0
      %444 = vmatpush1.bf16.msra.mxu0 %v418
      %445 = vmatprep.subr.bf16.mxu0 0
      %446 = vmatpush1.bf16.msra.mxu0 %v417
      %447 = vmatprep.subr.bf16.mxu0 0
      %448 = vmatpush1.bf16.msra.mxu0 %v416
      %449 = vmatprep.subr.bf16.mxu0 0
      %450 = vmatpush1.bf16.msra.mxu0 %v415
      %451 = vmatprep.subr.bf16.mxu0 0
      %452 = vmatpush1.bf16.msra.mxu0 %v414
      %453 = vmatprep.subr.bf16.mxu0 0
      %454 = vmatpush1.bf16.msra.mxu0 %v413
      %455 = vmatprep.subr.bf16.mxu0 0
      %456 = vmatpush1.bf16.msra.mxu0 %v412
      %457 = vmatprep.subr.bf16.mxu0 0
      %458 = vmatpush1.bf16.msra.mxu0 %v411
      %459 = vmatprep.subr.bf16.mxu0 0
      %460 = vmatpush2.bf16.msra.mxu0 %v426
      %461 = vmatprep.subr.bf16.mxu0 0
      %462 = vmatpush2.bf16.msra.mxu0 %v425
      %463 = vmatprep.subr.bf16.mxu0 0
      %464 = vmatpush2.bf16.msra.mxu0 %v424
      %465 = vmatprep.subr.bf16.mxu0 0
      %466 = vmatpush2.bf16.msra.mxu0 %v423
      %467 = vmatprep.subr.bf16.mxu0 0
      %468 = vmatpush2.bf16.msra.mxu0 %v422
      %469 = vmatprep.subr.bf16.mxu0 0
      %470 = vmatpush2.bf16.msra.mxu0 %v421
      %471 = vmatprep.subr.bf16.mxu0 0
      %472 = vmatpush2.bf16.msra.mxu0 %v420
      %473 = vmatprep.subr.bf16.mxu0 0
      %474 = vmatpush2.bf16.msra.mxu0 %v419
      %475 = vmatprep.mubr.bf16.mxu0 %v344
      %476 = vmatmul.mubr.bf16.gmra.mxu0 %v343
      %v477 = vpop.f32.mrf.mxu0
      %v478 = vadd.f32 0.0, %v477
      %v479 = vpop.f32.mrf.mxu0
      %v480 = vpop.f32.mrf.mxu0
      %v481 = vadd.f32 0.0, %v480
      %v482 = vpop.f32.mrf.mxu0
      %483 = vdwg.mxu0
      %v484 = vld [vmem:[%s294] sm:$0xf]
      %v485 = vld [vmem:[%s294 + $0x4] sm:$0xf]
      %v486 = vld [vmem:[%s4] sm:$0xf]
      %v487 = vld [vmem:[%s4 + $0x4] sm:$0xf]
      %v488 = vld [vmem:[%s4 + $0x8] sm:$0xf]
      %v489 = vld [vmem:[%s4 + $0xc] sm:$0xf]
      %v490 = vld [vmem:[%s4 + $0x10] sm:$0xf]
      %v491 = vld [vmem:[%s4 + $0x14] sm:$0xf]
      %v492 = vld [vmem:[%s4 + $0x18] sm:$0xf]
      %v493 = vld [vmem:[%s4 + $0x1c] sm:$0xf]
      %v494 = vld [vmem:[%s4 + $0x20] sm:$0xf]
      %v495 = vld [vmem:[%s4 + $0x24] sm:$0xf]
      %v496 = vld [vmem:[%s4 + $0x28] sm:$0xf]
      %v497 = vld [vmem:[%s4 + $0x2c] sm:$0xf]
      %v498 = vld [vmem:[%s4 + $0x30] sm:$0xf]
      %v499 = vld [vmem:[%s4 + $0x34] sm:$0xf]
      %v500 = vld [vmem:[%s4 + $0x38] sm:$0xf]
      %v501 = vld [vmem:[%s4 + $0x3c] sm:$0xf]
      %v502 = vld [vmem:[%s288] sm:$0xff]
      %v503 = vld [vmem:[%s288 + $0x8] sm:$0xff]
      %505 = vset.pattern.permute.xlu0 0
      %506 = vperm.xlu0 %505, %v502
      %v507 = vpop.permute.xlu0 %506
      %510 = vset.pattern.permute.xlu0 0
      %511 = vperm.xlu0 %510, %v503
      %v512 = vpop.permute.xlu0 %511
      %v514 = vmul.f32 %v478, %v507
      %v515 = vmul.f32 %v481, %v512
      %v518 = vunpack.c.l.b16 %v484
      %v519 = vunpack.c.l.b16 %v485
      %v520 = vpack.c.b16 %v519, %v518
      %v538 = vunpack.c.l.b16 %v486
      %v539 = vunpack.c.l.b16 %v487
      %v540 = vunpack.c.l.b16 %v488
      %v541 = vunpack.c.l.b16 %v489
      %v542 = vunpack.c.l.b16 %v490
      %v543 = vunpack.c.l.b16 %v491
      %v544 = vunpack.c.l.b16 %v492
      %v545 = vunpack.c.l.b16 %v493
      %v546 = vunpack.c.l.b16 %v494
      %v547 = vunpack.c.l.b16 %v495
      %v548 = vunpack.c.l.b16 %v496
      %v549 = vunpack.c.l.b16 %v497
      %v550 = vunpack.c.l.b16 %v498
      %v551 = vunpack.c.l.b16 %v499
      %v552 = vunpack.c.l.b16 %v500
      %v553 = vunpack.c.l.b16 %v501
      %v554 = vpack.c.b16 %v539, %v538
      %v555 = vpack.c.b16 %v541, %v540
      %v556 = vpack.c.b16 %v543, %v542
      %v557 = vpack.c.b16 %v545, %v544
      %v558 = vpack.c.b16 %v547, %v546
      %v559 = vpack.c.b16 %v549, %v548
      %v560 = vpack.c.b16 %v551, %v550
      %v561 = vpack.c.b16 %v553, %v552
      %570 = vmatprep.subr.bf16.mxu0 0
      %571 = vmatpush1.bf16.msra.mxu0 %v561
      %572 = vmatprep.subr.bf16.mxu0 0
      %573 = vmatpush1.bf16.msra.mxu0 %v560
      %574 = vmatprep.subr.bf16.mxu0 0
      %575 = vmatpush1.bf16.msra.mxu0 %v559
      %576 = vmatprep.subr.bf16.mxu0 0
      %577 = vmatpush1.bf16.msra.mxu0 %v558
      %578 = vmatprep.subr.bf16.mxu0 0
      %579 = vmatpush1.bf16.msra.mxu0 %v557
      %580 = vmatprep.subr.bf16.mxu0 0
      %581 = vmatpush1.bf16.msra.mxu0 %v556
      %582 = vmatprep.subr.bf16.mxu0 0
      %583 = vmatpush1.bf16.msra.mxu0 %v555
      %584 = vmatprep.subr.bf16.mxu0 0
      %585 = vmatpush1.bf16.msra.mxu0 %v554
      %586 = vmatprep.subr.bf16.mxu0 0
      %587 = vmatpush2.bf16.msra.mxu0 0
      %588 = vmatprep.subr.bf16.mxu0 0
      %589 = vmatpush2.bf16.msra.mxu0 0
      %590 = vmatprep.subr.bf16.mxu0 0
      %591 = vmatpush2.bf16.msra.mxu0 0
      %592 = vmatprep.subr.bf16.mxu0 0
      %593 = vmatpush2.bf16.msra.mxu0 0
      %594 = vmatprep.subr.bf16.mxu0 0
      %595 = vmatpush2.bf16.msra.mxu0 0
      %596 = vmatprep.subr.bf16.mxu0 0
      %597 = vmatpush2.bf16.msra.mxu0 0
      %598 = vmatprep.subr.bf16.mxu0 0
      %599 = vmatpush2.bf16.msra.mxu0 0
      %600 = vmatprep.subr.bf16.mxu0 0
      %601 = vmatpush2.bf16.msra.mxu0 0
      %602 = vmatprep.mubr.bf16.mxu0 0
      %603 = vmatmul.mubr.bf16.gmra.mxu0 %v520
      %v604 = vpop.f32.mrf.mxu0
      %v605 = vadd.f32 %v514, %v604
      %v606 = vpop.f32.mrf.mxu0
      %v607 = vpop.f32.mrf.mxu0
      %v608 = vadd.f32 %v515, %v607
      %v609 = vpop.f32.mrf.mxu0
      %610 = vdwg.mxu0
      %v611 = vmax.f32 %v605, 0.0
      %v612 = vmax.f32 %v608, 0.0
      %v613 = vpack.c.bf16 %v612, %v611
      %v614 = vld [vmem:[%s5] sm:$0xf]
      %v615 = vld [vmem:[%s5 + $0x4] sm:$0xf]
      %v616 = vld [vmem:[%s5 + $0x8] sm:$0xf]
      %v617 = vld [vmem:[%s5 + $0xc] sm:$0xf]
      %v618 = vld [vmem:[%s5 + $0x10] sm:$0xf]
      %v619 = vld [vmem:[%s5 + $0x14] sm:$0xf]
      %v620 = vld [vmem:[%s5 + $0x18] sm:$0xf]
      %v621 = vld [vmem:[%s5 + $0x1c] sm:$0xf]
      %v622 = vld [vmem:[%s5 + $0x20] sm:$0xf]
      %v623 = vld [vmem:[%s5 + $0x24] sm:$0xf]
      %v624 = vld [vmem:[%s5 + $0x28] sm:$0xf]
      %v625 = vld [vmem:[%s5 + $0x2c] sm:$0xf]
      %v626 = vld [vmem:[%s5 + $0x30] sm:$0xf]
      %v627 = vld [vmem:[%s5 + $0x34] sm:$0xf]
      %v628 = vld [vmem:[%s5 + $0x38] sm:$0xf]
      %v629 = vld [vmem:[%s5 + $0x3c] sm:$0xf]
      %v646 = vunpack.c.l.b16 %v614
      %v647 = vunpack.c.l.b16 %v615
      %v648 = vunpack.c.l.b16 %v616
      %v649 = vunpack.c.l.b16 %v617
      %v650 = vunpack.c.l.b16 %v618
      %v651 = vunpack.c.l.b16 %v619
      %v652 = vunpack.c.l.b16 %v620
      %v653 = vunpack.c.l.b16 %v621
      %v654 = vunpack.c.l.b16 %v622
      %v655 = vunpack.c.l.b16 %v623
      %v656 = vunpack.c.l.b16 %v624
      %v657 = vunpack.c.l.b16 %v625
      %v658 = vunpack.c.l.b16 %v626
      %v659 = vunpack.c.l.b16 %v627
      %v660 = vunpack.c.l.b16 %v628
      %v661 = vunpack.c.l.b16 %v629
      %v662 = vpack.c.b16 %v647, %v646
      %v663 = vpack.c.b16 %v649, %v648
      %v664 = vpack.c.b16 %v651, %v650
      %v665 = vpack.c.b16 %v653, %v652
      %v666 = vpack.c.b16 %v655, %v654
      %v667 = vpack.c.b16 %v657, %v656
      %v668 = vpack.c.b16 %v659, %v658
      %v669 = vpack.c.b16 %v661, %v660
      %678 = vmatprep.subr.bf16.mxu0 0
      %679 = vmatpush1.bf16.msra.mxu0 %v669
      %680 = vmatprep.subr.bf16.mxu0 0
      %681 = vmatpush1.bf16.msra.mxu0 %v668
      %682 = vmatprep.subr.bf16.mxu0 0
      %683 = vmatpush1.bf16.msra.mxu0 %v667
      %684 = vmatprep.subr.bf16.mxu0 0
      %685 = vmatpush1.bf16.msra.mxu0 %v666
      %686 = vmatprep.subr.bf16.mxu0 0
      %687 = vmatpush1.bf16.msra.mxu0 %v665
      %688 = vmatprep.subr.bf16.mxu0 0
      %689 = vmatpush1.bf16.msra.mxu0 %v664
      %690 = vmatprep.subr.bf16.mxu0 0
      %691 = vmatpush1.bf16.msra.mxu0 %v663
      %692 = vmatprep.subr.bf16.mxu0 0
      %693 = vmatpush1.bf16.msra.mxu0 %v662
      %694 = vmatprep.subr.bf16.mxu0 0
      %695 = vmatpush2.bf16.msra.mxu0 0
      %696 = vmatprep.subr.bf16.mxu0 0
      %697 = vmatpush2.bf16.msra.mxu0 0
      %698 = vmatprep.subr.bf16.mxu0 0
      %699 = vmatpush2.bf16.msra.mxu0 0
      %700 = vmatprep.subr.bf16.mxu0 0
      %701 = vmatpush2.bf16.msra.mxu0 0
      %702 = vmatprep.subr.bf16.mxu0 0
      %703 = vmatpush2.bf16.msra.mxu0 0
      %704 = vmatprep.subr.bf16.mxu0 0
      %705 = vmatpush2.bf16.msra.mxu0 0
      %706 = vmatprep.subr.bf16.mxu0 0
      %707 = vmatpush2.bf16.msra.mxu0 0
      %708 = vmatprep.subr.bf16.mxu0 0
      %709 = vmatpush2.bf16.msra.mxu0 0
      %710 = vmatprep.mubr.bf16.mxu0 0
      %711 = vmatmul.mubr.bf16.gmra.mxu0 %v613
      %v712 = vpop.f32.mrf.mxu0
      %v713 = vadd.f32 0.0, %v712
      %v714 = vpop.f32.mrf.mxu0
      %v715 = vpop.f32.mrf.mxu0
      %v716 = vadd.f32 0.0, %v715
      %v717 = vpop.f32.mrf.mxu0
      %718 = vdwg.mxu0
      %719 = vst [vmem:[%s300] sm:$0xff] %v713
      %720 = vst [vmem:[%s300 + $0x8] sm:$0xff] %v716
      %s721 = smul.u32 2, %s17
      %p722 = scmp.lt.s32.totalorder %s721, 3
      %s723 = scalar_select %p722, %s721, 3
      %s724 = smul.addr %s723, 8
      %s725 = scalar_lea.vmem %s6, %s724
      // Predicated region
      $region45: #{supervised_graphsage_forward.3} parent=43 // pred_check
        %p726 = pneg %p176
      $region46: #{supervised_graphsage_forward.3} parent=43 // pred_check_branch
        %728 = sbr.rel (%p726) target = $region48
      $region47: #{supervised_graphsage_forward.3} parent=43 // pred_region
        %s729 = smul.u32 2, %s17
      $region48: #{supervised_graphsage_forward.3} parent=43 // pred_fallthru
        _
    $region44: #{supervised_graphsage_forward.3} parent=5 // pred_fallthru
      _
    %p730 = scmp.le.s32.totalorder 2, %s12
    // Predicated region
    $region49: #{supervised_graphsage_forward.3} parent=5 // pred_check
      %p731 = pneg %p730
    $region50: #{supervised_graphsage_forward.3} parent=5 // pred_check_branch
      %733 = sbr.rel (%p731) target = $region52
    $region51: #{supervised_graphsage_forward.3} parent=5 // pred_region
      %s734 = ssub.s32 %s12, 2
      // Predicated region
      $region53: #{supervised_graphsage_forward.3} parent=51 // pred_check
        %p735 = pneg %p182
      $region54: #{supervised_graphsage_forward.3} parent=51 // pred_check_branch
        %737 = sbr.rel (%p735) target = $region56
      $region55: #{supervised_graphsage_forward.3} parent=51 // pred_region
        %s738 = smul.u32 2, %s18
        %p739 = scmp.lt.s32.totalorder %s738, 3
        %s740 = scalar_select %p739, %s738, 3
        %s741 = smul.addr %s740, 8
        %s742 = scalar_lea.vmem %s6, %s741
      $region56: #{supervised_graphsage_forward.3} parent=51 // pred_fallthru
        _
    $region52: #{supervised_graphsage_forward.3} parent=5 // pred_fallthru
      _
  $region6: #{supervised_graphsage_forward.3} parent=0 // loop_footer
    %s16 = sadd.s32 1, %s12
  $region7: #{supervised_graphsage_forward.3} parent=0 // loop_footer_branch
    %11 = sbr.rel target = $region3
  $region8: #{supervised_graphsage_forward.3} parent=0 // loop_exit
    _

</llo_original>
